<compile_context>
chip_gen: v7x
topology: tpu7x:2x2x1
jax: 0.10.0
libtpu: 0.0.40
codegen_flags: <defaults>
</compile_context>

<pallas_src>
import jax
import jax.numpy as jnp
from jax.experimental import pallas as pl
from jax.experimental.pallas import tpu as pltpu


def loreft_kernel(x_ref, m_ref, b_ref, rt_ref, o_ref):
    # x_ref:  (TN, D)    activation tile (native dtype)
    # m_ref:  (D, r_pad) fused weight  M = W^T - R   (resident across grid)
    # b_ref:  (1, r_pad) learned_source bias (f32)
    # rt_ref: (r_pad, D) R^T
    # o_ref:  (TN, D)    output tile, same dtype as input
    x = x_ref[...]
    # t = act_fn(learned_source(x)) - rotated_base  ==  x @ (W^T - R) + b  (act_fn = identity)
    t = jnp.dot(x, m_ref[...], preferred_element_type=jnp.float32) + b_ref[...]
    # delta = t @ R^T ; residual add in f32 (matches torch's f32 math), cast once on store.
    delta = jnp.dot(t.astype(rt_ref.dtype), rt_ref[...],
                    preferred_element_type=jnp.float32)
    o_ref[...] = (x.astype(jnp.float32) + delta).astype(o_ref.dtype)


def _round_up(v, m):
    return ((v + m - 1) // m) * m


def _round_down(v, m):
    return (v // m) * m


def _vmem_limit_bytes():
    """~75% of physical per-core VMEM (48 MiB on v7x, 96 MiB on v5e/v6e)."""
    cap = 64 * 1024 * 1024  # conservative default = v7x per-TC capacity
    try:
        cap = int(pltpu.get_tpu_info().vmem_capacity_bytes)
    except Exception:
        pass
    return min(int(cap * 3 // 4), 100 * 1024 * 1024)


def _pick_tile_rows(n_rows, d, x_itemsize, w_itemsize, r_pad, weight_buffers,
                    vmem_limit, align):
    """Largest row-tile whose full VMEM footprint fits under the scoped limit."""
    margin = 4 * 1024 * 1024  # headroom for compiler-internal scratch
    weight_bytes = weight_buffers * (2 * d * r_pad * w_itemsize + r_pad * 4)
    budget = max(vmem_limit - margin - weight_bytes, 2 * 1024 * 1024)
    # in + out tiles (double-buffered) + ~2 f32 (TN, D) intermediates + (TN, r_pad) t
    per_row = 4 * d * max(int(x_itemsize), 1) + 8 * d + 4 * r_pad
    tn = budget // per_row
    tn = min(tn, 1024)
    if n_rows >= 4 * align:                       # keep >=4 grid steps (v7x megacore + overlap)
        tn = min(tn, max(align, _round_down(n_rows // 4, align)))
    tn = min(tn, _round_up(n_rows, align))        # never allocate a block taller than the input
    return int(max(align, _round_down(tn, align)))


def _resident_spec(block_shape):
    """Constant-index BlockSpec; single-buffered when the API allows it."""
    idx = lambda i: (0,) * len(block_shape)
    try:
        return pl.BlockSpec(block_shape, idx, pipeline_mode=pl.Buffered(1)), 1
    except Exception:
        return pl.BlockSpec(block_shape, idx), 2


def loreft_forward(base, R, W, b, *, tile_rows=None):
    """base: [..., D]; R: [D, r]; W: [r, D] (torch Linear layout); b: [r]."""
    orig_shape = base.shape
    D = int(orig_shape[-1])
    r = int(R.shape[1])
    x = base.reshape(-1, D)
    N = int(x.shape[0])

    # ---- one-time parameter prep (outside the kernel) ------------------------
    # Fuse M = W^T - R, RT = R^T; zero-pad the low-rank dim to a multiple of 8
    # (numerically exact).  Match the activation dtype for bf16 inputs so both
    # matmuls are native-bf16 MXU passes; accumulation stays f32 in-kernel.
    w_dtype = jnp.bfloat16 if base.dtype == jnp.bfloat16 else jnp.float32
    r_pad = max(8, _round_up(r, 8))
    R32 = R.astype(jnp.float32)
    M = W.astype(jnp.float32).T - R32                 # (D, r)
    RT = R32.T                                        # (r, D)
    b2 = b.astype(jnp.float32).reshape(1, r)
    if r_pad != r:
        M = jnp.pad(M, ((0, 0), (0, r_pad - r)))
        RT = jnp.pad(RT, ((0, r_pad - r), (0, 0)))
        b2 = jnp.pad(b2, ((0, 0), (0, r_pad - r)))
    M = M.astype(w_dtype)
    RT = RT.astype(w_dtype)

    x_itemsize = int(jnp.dtype(base.dtype).itemsize)
    align = {4: 8, 2: 16, 1: 32}.get(x_itemsize, 8)   # sublane packing for sub-32-bit dtypes
    vmem_limit = _vmem_limit_bytes()

    m_spec, nbuf = _resident_spec((D, r_pad))
    b_spec, _ = _resident_spec((1, r_pad))
    rt_spec, _ = _resident_spec((r_pad, D))

    if tile_rows is None:
        TN = _pick_tile_rows(N, D, x_itemsize, jnp.dtype(w_dtype).itemsize,
                             r_pad, nbuf, vmem_limit, align)
    else:
        TN = max(align, _round_down(int(tile_rows), align))

    num_tiles = pl.cdiv(N, TN)
    # NOTE: no jnp.pad of x and no out[:N] slice — boundary blocks are masked by
    # Pallas and each row is independent, so a ragged last tile costs nothing.
    # NOTE: for production keep D a multiple of 128 so output stores are lane-dense.

    def _run(m_s, b_s, rt_s):
        return pl.pallas_call(
            loreft_kernel,
            out_shape=jax.ShapeDtypeStruct((N, D), base.dtype),
            grid=(num_tiles,),
            in_specs=[
                pl.BlockSpec((TN, D), lambda i: (i, 0)),   # activations: row-tiled
                m_s,                                        # M = W^T - R (resident)
                b_s,                                        # bias        (resident)
                rt_s,                                       # R^T         (resident)
            ],
            out_specs=pl.BlockSpec((TN, D), lambda i: (i, 0)),
            compiler_params=pltpu.CompilerParams(
                dimension_semantics=("parallel",),          # lets v7x shard rows over both TCs
                vmem_limit_bytes=vmem_limit,
            ),
        )(x, M, b2, RT)

    try:
        out = _run(m_spec, b_spec, rt_spec)
    except Exception:
        # Fall back to default double-buffered weight specs if this JAX/Mosaic
        # version rejects pipeline_mode=pl.Buffered(1).
        plain = lambda s: pl.BlockSpec(s, lambda i: (0,) * len(s))
        out = _run(plain((D, r_pad)), plain((1, r_pad)), plain((r_pad, D)))

    return out.reshape(orig_shape)


def loreft_reference(base, R, W, b):
    """Plain-JAX reference of the original (unfused) torch math, all in f32."""
    x = base.astype(jnp.float32)
    t = (x @ W.T + b) - x @ R
    return (x + t @ R.T).astype(base.dtype)


def init_params(key, embed_dim, low_rank):
    """Deterministic parameter init mirroring the torch module's shapes."""
    k1, k2, k3 = jax.random.split(key, 3)
    # orthogonal init for rotate_layer.weight (embed_dim, low_rank)
    a = jax.random.normal(k1, (embed_dim, low_rank), dtype=jnp.float32)
    q, _ = jnp.linalg.qr(a)
    R = q[:, :low_rank]
    # torch.nn.Linear(embed_dim, low_rank): weight (low_rank, embed_dim), bias (low_rank,)
    bound = 1.0 / (embed_dim ** 0.5)
    W = jax.random.uniform(k2, (low_rank, embed_dim), jnp.float32, -bound, bound)
    b = jax.random.uniform(k3, (low_rank,), jnp.float32, -bound, bound)
    return R, W, b


if __name__ == "__main__":
    key = jax.random.PRNGKey(0)
    batch, seq, embed_dim, low_rank = 2, 8, 32, 4

    k_in, k_p = jax.random.split(key)
    base = jax.random.normal(k_in, (batch, seq, embed_dim), dtype=jnp.float32)
    R, W, b = init_params(k_p, embed_dim, low_rank)

    # --- f32 path (matches the torch module's f32 math) -----------------------
    out = jax.block_until_ready(loreft_forward(base, R, W, b))
    ref = loreft_reference(base, R, W, b)
    assert out.shape == base.shape and out.dtype == base.dtype
    assert jnp.allclose(out, ref, atol=1e-4, rtol=1e-4), \
        float(jnp.max(jnp.abs(out - ref)))

    # --- ragged boundary path (N not a multiple of the row tile; no padding) ---
    base_r = jax.random.normal(k_in, (batch, 9, embed_dim), dtype=jnp.float32)
    out_r = jax.block_until_ready(loreft_forward(base_r, R, W, b, tile_rows=8))
    ref_r = loreft_reference(base_r, R, W, b)
    assert jnp.allclose(out_r, ref_r, atol=1e-4, rtol=1e-4), \
        float(jnp.max(jnp.abs(out_r - ref_r)))

    # --- bf16 path (bf16 activations + bf16 weights, f32 accumulation) --------
    base_h = base.astype(jnp.bfloat16)
    out_h = jax.block_until_ready(loreft_forward(base_h, R, W, b))
    assert out_h.dtype == jnp.bfloat16 and out_h.shape == base_h.shape
    ref_h = loreft_reference(base_h, R, W, b).astype(jnp.float32)
    assert jnp.allclose(out_h.astype(jnp.float32), ref_h, atol=1e-1, rtol=1e-1), \
        float(jnp.max(jnp.abs(out_h.astype(jnp.float32) - ref_h)))

    print("KERNEL_OK")
</pallas_src>

<mosaic_0001>
module attributes {stable_mosaic.version = 11 : i64} {
  func.func @loreft_kernel(%arg0: i32, %arg1: memref<16x32xf32, #tpu.memory_space<vmem>>, %arg2: memref<32x8xf32, #tpu.memory_space<vmem>>, %arg3: memref<1x8xf32, #tpu.memory_space<vmem>>, %arg4: memref<8x32xf32, #tpu.memory_space<vmem>>, %arg5: memref<16x32xf32, #tpu.memory_space<vmem>>) attributes {dimension_semantics = [#tpu.dimension_semantics<parallel>], iteration_bounds = array<i64: 1>, scalar_prefetch = 0 : i64, scratch_operands = 0 : i64, tpu.core_type = #tpu.core_type<tc>, window_params = [{transform_indices = @transform_0, window_bounds = array<i64: 16, 32>}, {pipeline_mode = #tpu.pipeline_mode<synchronous>, transform_indices = @transform_1, window_bounds = array<i64: 32, 8>}, {pipeline_mode = #tpu.pipeline_mode<synchronous>, transform_indices = @transform_2, window_bounds = array<i64: 1, 8>}, {pipeline_mode = #tpu.pipeline_mode<synchronous>, transform_indices = @transform_3, window_bounds = array<i64: 8, 32>}, {transform_indices = @transform_4, window_bounds = array<i64: 16, 32>}]} {
    %c0 = arith.constant 0 : index
    %c0_0 = arith.constant 0 : index
    %0 = vector.load %arg1[%c0, %c0_0] : memref<16x32xf32, #tpu.memory_space<vmem>>, vector<16x32xf32>
    %c0_1 = arith.constant 0 : index
    %c0_2 = arith.constant 0 : index
    %1 = vector.load %arg2[%c0_1, %c0_2] : memref<32x8xf32, #tpu.memory_space<vmem>>, vector<32x8xf32>
    %cst = arith.constant dense<0.000000e+00> : vector<16x8xf32>
    %2 = tpu.matmul %0, %1, %cst {dimension_numbers = #tpu.dot_dimension_numbers<[1], [0], [0], [1], [0, 0, 1, 1], [], []>} : vector<16x32xf32>, vector<32x8xf32>, vector<16x8xf32> -> vector<16x8xf32>
    %c0_3 = arith.constant 0 : index
    %c0_4 = arith.constant 0 : index
    %3 = vector.load %arg3[%c0_3, %c0_4] : memref<1x8xf32, #tpu.memory_space<vmem>>, vector<1x8xf32>
    %4 = vector.broadcast %3 : vector<1x8xf32> to vector<16x8xf32>
    %5 = arith.addf %2, %4 : vector<16x8xf32>
    %c0_5 = arith.constant 0 : index
    %c0_6 = arith.constant 0 : index
    %6 = vector.load %arg4[%c0_5, %c0_6] : memref<8x32xf32, #tpu.memory_space<vmem>>, vector<8x32xf32>
    %cst_7 = arith.constant dense<0.000000e+00> : vector<16x32xf32>
    %7 = tpu.matmul %5, %6, %cst_7 {dimension_numbers = #tpu.dot_dimension_numbers<[1], [0], [0], [1], [0, 0, 1, 1], [], []>} : vector<16x8xf32>, vector<8x32xf32>, vector<16x32xf32> -> vector<16x32xf32>
    %8 = arith.addf %0, %7 : vector<16x32xf32>
    %c0_8 = arith.constant 0 : index
    %c0_9 = arith.constant 0 : index
    %9 = vector.load %arg5[%c0_8, %c0_9] : memref<16x32xf32, #tpu.memory_space<vmem>>, vector<16x32xf32>
    tpu.vector_store %arg5[%c0_8, %c0_9], %8 {strides = array<i32>} : memref<16x32xf32, #tpu.memory_space<vmem>>, vector<16x32xf32>,
    return
  }
  func.func @transform_0(%arg0: i32) -> (i32, i32) {
    %c0_i32 = arith.constant 0 : i32
    %c0_i32_0 = arith.constant 0 : i32
    return %arg0, %c0_i32 : i32, i32
  }
  func.func @transform_1(%arg0: i32) -> (i32, i32) {
    %c0_i32 = arith.constant 0 : i32
    %c0_i32_0 = arith.constant 0 : i32
    %c0_i32_1 = arith.constant 0 : i32
    return %c0_i32, %c0_i32_0 : i32, i32
  }
  func.func @transform_2(%arg0: i32) -> (i32, i32) {
    %c0_i32 = arith.constant 0 : i32
    %c0_i32_0 = arith.constant 0 : i32
    %c0_i32_1 = arith.constant 0 : i32
    return %c0_i32, %c0_i32_0 : i32, i32
  }
  func.func @transform_3(%arg0: i32) -> (i32, i32) {
    %c0_i32 = arith.constant 0 : i32
    %c0_i32_0 = arith.constant 0 : i32
    %c0_i32_1 = arith.constant 0 : i32
    return %c0_i32, %c0_i32_0 : i32, i32
  }
  func.func @transform_4(%arg0: i32) -> (i32, i32) {
    %c0_i32 = arith.constant 0 : i32
    %c0_i32_0 = arith.constant 0 : i32
    return %arg0, %c0_i32 : i32, i32
  }
}

module attributes {stable_mosaic.version = 11 : i64} {
  func.func @loreft_kernel(%arg0: i32, %arg1: memref<16x32xf32, #tpu.memory_space<vmem>>, %arg2: memref<32x8xf32, #tpu.memory_space<vmem>>, %arg3: memref<1x8xf32, #tpu.memory_space<vmem>>, %arg4: memref<8x32xf32, #tpu.memory_space<vmem>>, %arg5: memref<16x32xf32, #tpu.memory_space<vmem>>) attributes {dimension_semantics = [#tpu.dimension_semantics<parallel>], iteration_bounds = array<i64: 1>, scalar_prefetch = 0 : i64, scratch_operands = 0 : i64, tpu.core_type = #tpu.core_type<tc>, window_params = [{transform_indices = @transform_0, window_bounds = array<i64: 16, 32>}, {pipeline_mode = #tpu.pipeline_mode<synchronous>, transform_indices = @transform_1, window_bounds = array<i64: 32, 8>}, {pipeline_mode = #tpu.pipeline_mode<synchronous>, transform_indices = @transform_2, window_bounds = array<i64: 1, 8>}, {pipeline_mode = #tpu.pipeline_mode<synchronous>, transform_indices = @transform_3, window_bounds = array<i64: 8, 32>}, {transform_indices = @transform_4, window_bounds = array<i64: 16, 32>}]} {
    %c0 = arith.constant 0 : index
    %c0_0 = arith.constant 0 : index
    %0 = vector.load %arg1[%c0, %c0_0] : memref<16x32xf32, #tpu.memory_space<vmem>>, vector<16x32xf32>
    %c0_1 = arith.constant 0 : index
    %c0_2 = arith.constant 0 : index
    %1 = vector.load %arg2[%c0_1, %c0_2] : memref<32x8xf32, #tpu.memory_space<vmem>>, vector<32x8xf32>
    %cst = arith.constant dense<0.000000e+00> : vector<16x8xf32>
    %2 = tpu.matmul %0, %1, %cst {dimension_numbers = #tpu.dot_dimension_numbers<[1], [0], [0], [1], [0, 0, 1, 1], [], []>} : vector<16x32xf32>, vector<32x8xf32>, vector<16x8xf32> -> vector<16x8xf32>
    %c0_3 = arith.constant 0 : index
    %c0_4 = arith.constant 0 : index
    %3 = vector.load %arg3[%c0_3, %c0_4] : memref<1x8xf32, #tpu.memory_space<vmem>>, vector<1x8xf32>
    %4 = vector.broadcast %3 : vector<1x8xf32> to vector<16x8xf32>
    %5 = arith.addf %2, %4 : vector<16x8xf32>
    %c0_5 = arith.constant 0 : index
    %c0_6 = arith.constant 0 : index
    %6 = vector.load %arg4[%c0_5, %c0_6] : memref<8x32xf32, #tpu.memory_space<vmem>>, vector<8x32xf32>
    %cst_7 = arith.constant dense<0.000000e+00> : vector<16x32xf32>
    %7 = tpu.matmul %5, %6, %cst_7 {dimension_numbers = #tpu.dot_dimension_numbers<[1], [0], [0], [1], [0, 0, 1, 1], [], []>} : vector<16x8xf32>, vector<8x32xf32>, vector<16x32xf32> -> vector<16x32xf32>
    %8 = arith.addf %0, %7 : vector<16x32xf32>
    %c0_8 = arith.constant 0 : index
    %c0_9 = arith.constant 0 : index
    %9 = vector.load %arg5[%c0_8, %c0_9] : memref<16x32xf32, #tpu.memory_space<vmem>>, vector<16x32xf32>
    tpu.vector_store %arg5[%c0_8, %c0_9], %8 {strides = array<i32>} : memref<16x32xf32, #tpu.memory_space<vmem>>, vector<16x32xf32>,
    return
  }
  func.func @transform_0(%arg0: i32) -> (i32, i32) {
    %c0_i32 = arith.constant 0 : i32
    %c0_i32_0 = arith.constant 0 : i32
    return %arg0, %c0_i32 : i32, i32
  }
  func.func @transform_1(%arg0: i32) -> (i32, i32) {
    %c0_i32 = arith.constant 0 : i32
    %c0_i32_0 = arith.constant 0 : i32
    %c0_i32_1 = arith.constant 0 : i32
    return %c0_i32, %c0_i32_0 : i32, i32
  }
  func.func @transform_2(%arg0: i32) -> (i32, i32) {
    %c0_i32 = arith.constant 0 : i32
    %c0_i32_0 = arith.constant 0 : i32
    %c0_i32_1 = arith.constant 0 : i32
    return %c0_i32, %c0_i32_0 : i32, i32
  }
  func.func @transform_3(%arg0: i32) -> (i32, i32) {
    %c0_i32 = arith.constant 0 : i32
    %c0_i32_0 = arith.constant 0 : i32
    %c0_i32_1 = arith.constant 0 : i32
    return %c0_i32, %c0_i32_0 : i32, i32
  }
  func.func @transform_4(%arg0: i32) -> (i32, i32) {
    %c0_i32 = arith.constant 0 : i32
    %c0_i32_0 = arith.constant 0 : i32
    return %arg0, %c0_i32 : i32, i32
  }
}

</mosaic_0001>

<llo_original>
// kernel: tpu_custom_call.1
$region0: #{tpu_custom_call.1}
  #allocation0 [shape = 'u32[]', space=smem, size = 0x4, offset = 0x4, fixed_abs, tag = 'smem constant byte address 0x4 - core index']
  #allocation1 [shape = 'u32[144,128]{1,0:T(1,128)}', space=vmem, size = 0x12000, scoped, tag = 'internal scratch']
  %s0 = inlined_call_operand.vmem [shape: f32[16,32], index: 0, kind: input, shape index: {}]
  %s1 = inlined_call_operand.vmem [shape: f32[32,8], index: 1, kind: input, shape index: {}]
  %s2 = inlined_call_operand.vmem [shape: f32[1,8], index: 2, kind: input, shape index: {}]
  %s3 = inlined_call_operand.vmem [shape: f32[8,32], index: 3, kind: input, shape index: {}]
  %s4 = inlined_call_operand.hbm [shape: f32[16,32], index: 4, kind: output, shape index: {}]
  %s5 = sld [smem:[#allocation0]]
  $region26: #{tpu_custom_call.1} parent=0
    _
  %s7 = ssub.s32 1, %s5
  %s8 = scalar_select 0, %s7, %s5
  $region1: #{tpu_custom_call.1} parent=0
    #allocation2 [shape = 'u8[8192]{0}', space=vmem, size = 0x2000, scoped, tag = 'output window, operand 0, single buffered']
    #allocation3 [shape = 's32[1]{0}', space=sflag, size = 0x4, scoped, tag = 'scoped memory for tpu_custom_call.1']
    %9 = vsyncpa [#allocation3], 0
    // Predicated region
    $region2: #{tpu_custom_call.1} parent=1 // pred_check
      _
    $region3: #{tpu_custom_call.1} parent=1 // pred_check_branch
      %11 = sbr.rel (0) target = $region5
    $region4: #{tpu_custom_call.1} parent=1 // pred_region
      _
    $region5: #{tpu_custom_call.1} parent=1 // pred_fallthru
      _
    // Predicated region
    $region6: #{tpu_custom_call.1} parent=1 // pred_check
      _
    $region7: #{tpu_custom_call.1} parent=1 // pred_check_branch
      %13 = sbr.rel (0) target = $region9
    $region8: #{tpu_custom_call.1} parent=1 // pred_region
      _
    $region9: #{tpu_custom_call.1} parent=1 // pred_fallthru
      _
    // Predicated region
    $region10: #{tpu_custom_call.1} parent=1 // pred_check
      _
    $region11: #{tpu_custom_call.1} parent=1 // pred_check_branch
      %15 = sbr.rel (0) target = $region13
    $region12: #{tpu_custom_call.1} parent=1 // pred_region
      _
    $region13: #{tpu_custom_call.1} parent=1 // pred_fallthru
      _
    // Predicated region
    $region14: #{tpu_custom_call.1} parent=1 // pred_check
      _
    $region15: #{tpu_custom_call.1} parent=1 // pred_check_branch
      %17 = sbr.rel (0) target = $region17
    $region16: #{tpu_custom_call.1} parent=1 // pred_region
      _
    $region17: #{tpu_custom_call.1} parent=1 // pred_fallthru
      _
    %v18 = vld [vmem:[%s0] sm:$0xff]
    %v19 = vld [vmem:[%s0 + $0x8] sm:$0xff]
    %v20 = vld [vmem:[%s1] sm:$0xff]
    %v21 = vld [vmem:[%s1 + $0x8] sm:$0xff]
    %v22 = vld [vmem:[%s1 + $0x10] sm:$0xff]
    %v23 = vld [vmem:[%s1 + $0x18] sm:$0xff]
    %v24 = vld [vmem:[%s2] sm:$0x1]
    %v26 = vlaneseq
    %v27 = vshrl.u32 %v26, 7
    %v28 = vsub.s32 0, %v27
    %v29 = vrot.slane %v24, %v28
    %vm31 = vcmask 261120
    %v33 = vsel %vm31, %v18, 0
    %v36 = vsel %vm31, %v19, 0
    %38 = vmatprep.subr.mxu0 0.0
    %39 = vmatpush1.msra.mxu0 %v20
    %40 = vmatprep.subr.mxu0 0.0
    %41 = vmatpush1.msra.mxu0 %v21
    %42 = vmatprep.subr.mxu0 0.0
    %43 = vmatpush1.msra.mxu0 %v22
    %44 = vmatprep.subr.mxu0 0.0
    %45 = vmatpush1.msra.mxu0 %v23
    %46 = vmatprep.subr.mxu0 0.0
    %47 = vmatpush1.msra.mxu0 0.0
    %48 = vmatprep.subr.mxu0 0.0
    %49 = vmatpush1.msra.mxu0 0.0
    %50 = vmatprep.subr.mxu0 0.0
    %51 = vmatpush1.msra.mxu0 0.0
    %52 = vmatprep.subr.mxu0 0.0
    %53 = vmatpush1.msra.mxu0 0.0
    %54 = vmatprep.subr.mxu0 0.0
    %55 = vmatpush1.msra.mxu0 0.0
    %56 = vmatprep.subr.mxu0 0.0
    %57 = vmatpush1.msra.mxu0 0.0
    %58 = vmatprep.subr.mxu0 0.0
    %59 = vmatpush1.msra.mxu0 0.0
    %60 = vmatprep.subr.mxu0 0.0
    %61 = vmatpush1.msra.mxu0 0.0
    %62 = vmatprep.subr.mxu0 0.0
    %63 = vmatpush1.msra.mxu0 0.0
    %64 = vmatprep.subr.mxu0 0.0
    %65 = vmatpush1.msra.mxu0 0.0
    %66 = vmatprep.subr.mxu0 0.0
    %67 = vmatpush1.msra.mxu0 0.0
    %68 = vmatprep.subr.mxu0 0.0
    %69 = vmatpush1.msra.mxu0 0.0
    %70 = vmatprep.subr.mxu0 0.0
    %71 = vmatpush1.msra.mxu0 0.0
    %72 = vmatprep.subr.mxu0 0.0
    %73 = vmatpush1.msra.mxu0 0.0
    %74 = vmatprep.subr.mxu0 0.0
    %75 = vmatpush1.msra.mxu0 0.0
    %76 = vmatprep.subr.mxu0 0.0
    %77 = vmatpush1.msra.mxu0 0.0
    %78 = vmatprep.subr.mxu0 0.0
    %79 = vmatpush1.msra.mxu0 0.0
    %80 = vmatprep.subr.mxu0 0.0
    %81 = vmatpush1.msra.mxu0 0.0
    %82 = vmatprep.subr.mxu0 0.0
    %83 = vmatpush1.msra.mxu0 0.0
    %84 = vmatprep.subr.mxu0 0.0
    %85 = vmatpush1.msra.mxu0 0.0
    %86 = vmatprep.subr.mxu0 0.0
    %87 = vmatpush1.msra.mxu0 0.0
    %88 = vmatprep.subr.mxu0 0.0
    %89 = vmatpush1.msra.mxu0 0.0
    %90 = vmatprep.subr.mxu0 0.0
    %91 = vmatpush1.msra.mxu0 0.0
    %92 = vmatprep.subr.mxu0 0.0
    %93 = vmatpush1.msra.mxu0 0.0
    %94 = vmatprep.subr.mxu0 0.0
    %95 = vmatpush1.msra.mxu0 0.0
    %96 = vmatprep.subr.mxu0 0.0
    %97 = vmatpush1.msra.mxu0 0.0
    %98 = vmatprep.subr.mxu0 0.0
    %99 = vmatpush1.msra.mxu0 0.0
    %100 = vmatprep.subr.mxu0 0.0
    %101 = vmatpush1.msra.mxu0 0.0
    %102 = vmatprep.mubr.f32.mxu0 0.0
    %103 = vmatmul.mubr.f32.gmra.mrb[0].mxu0 %v33
    %v104 = vpop.f32.mrb[0].mxu0
    %v105 = vadd.f32 %v29, %v104
    %v106 = vpop.f32.mrb[0].mxu0
    %107 = vmatprep.mubr.f32.mxu0 0.0
    %108 = vmatmul.mubr.f32.gmra.mrb[0].mxu0 %v36
    %v109 = vpop.f32.mrb[0].mxu0
    %v110 = vadd.f32 %v29, %v109
    %v111 = vpop.f32.mrb[0].mxu0
    %112 = vdwg.mxu0
    %v113 = vld [vmem:[%s3] sm:$0xff]
    %vm114 = vcmask 64512
    %v116 = vsel %vm114, %v105, 0
    %v119 = vsel %vm114, %v110, 0
    %121 = vmatprep.subr.mxu0 0.0
    %122 = vmatpush1.msra.mxu0 %v113
    %123 = vmatprep.subr.mxu0 0.0
    %124 = vmatpush1.msra.mxu0 0.0
    %125 = vmatprep.subr.mxu0 0.0
    %126 = vmatpush1.msra.mxu0 0.0
    %127 = vmatprep.subr.mxu0 0.0
    %128 = vmatpush1.msra.mxu0 0.0
    %129 = vmatprep.subr.mxu0 0.0
    %130 = vmatpush1.msra.mxu0 0.0
    %131 = vmatprep.subr.mxu0 0.0
    %132 = vmatpush1.msra.mxu0 0.0
    %133 = vmatprep.subr.mxu0 0.0
    %134 = vmatpush1.msra.mxu0 0.0
    %135 = vmatprep.subr.mxu0 0.0
    %136 = vmatpush1.msra.mxu0 0.0
    %137 = vmatprep.subr.mxu0 0.0
    %138 = vmatpush1.msra.mxu0 0.0
    %139 = vmatprep.subr.mxu0 0.0
    %140 = vmatpush1.msra.mxu0 0.0
    %141 = vmatprep.subr.mxu0 0.0
    %142 = vmatpush1.msra.mxu0 0.0
    %143 = vmatprep.subr.mxu0 0.0
    %144 = vmatpush1.msra.mxu0 0.0
    %145 = vmatprep.subr.mxu0 0.0
    %146 = vmatpush1.msra.mxu0 0.0
    %147 = vmatprep.subr.mxu0 0.0
    %148 = vmatpush1.msra.mxu0 0.0
    %149 = vmatprep.subr.mxu0 0.0
    %150 = vmatpush1.msra.mxu0 0.0
    %151 = vmatprep.subr.mxu0 0.0
    %152 = vmatpush1.msra.mxu0 0.0
    %153 = vmatprep.subr.mxu0 0.0
    %154 = vmatpush1.msra.mxu0 0.0
    %155 = vmatprep.subr.mxu0 0.0
    %156 = vmatpush1.msra.mxu0 0.0
    %157 = vmatprep.subr.mxu0 0.0
    %158 = vmatpush1.msra.mxu0 0.0
    %159 = vmatprep.subr.mxu0 0.0
    %160 = vmatpush1.msra.mxu0 0.0
    %161 = vmatprep.subr.mxu0 0.0
    %162 = vmatpush1.msra.mxu0 0.0
    %163 = vmatprep.subr.mxu0 0.0
    %164 = vmatpush1.msra.mxu0 0.0
    %165 = vmatprep.subr.mxu0 0.0
    %166 = vmatpush1.msra.mxu0 0.0
    %167 = vmatprep.subr.mxu0 0.0
    %168 = vmatpush1.msra.mxu0 0.0
    %169 = vmatprep.subr.mxu0 0.0
    %170 = vmatpush1.msra.mxu0 0.0
    %171 = vmatprep.subr.mxu0 0.0
    %172 = vmatpush1.msra.mxu0 0.0
    %173 = vmatprep.subr.mxu0 0.0
    %174 = vmatpush1.msra.mxu0 0.0
    %175 = vmatprep.subr.mxu0 0.0
    %176 = vmatpush1.msra.mxu0 0.0
    %177 = vmatprep.subr.mxu0 0.0
    %178 = vmatpush1.msra.mxu0 0.0
    %179 = vmatprep.subr.mxu0 0.0
    %180 = vmatpush1.msra.mxu0 0.0
    %181 = vmatprep.subr.mxu0 0.0
    %182 = vmatpush1.msra.mxu0 0.0
    %183 = vmatprep.subr.mxu0 0.0
    %184 = vmatpush1.msra.mxu0 0.0
    %185 = vmatprep.mubr.f32.mxu0 0.0
    %186 = vmatmul.mubr.f32.gmra.mrb[0].mxu0 %v116
    %v187 = vpop.f32.mrb[0].mxu0
    %v188 = vadd.f32 0.0, %v187
    %v189 = vpop.f32.mrb[0].mxu0
    %190 = vmatprep.mubr.f32.mxu0 0.0
    %191 = vmatmul.mubr.f32.gmra.mrb[0].mxu0 %v119
    %v192 = vpop.f32.mrb[0].mxu0
    %v193 = vadd.f32 0.0, %v192
    %v194 = vpop.f32.mrb[0].mxu0
    %195 = vdwg.mxu0
    %v196 = vadd.f32 %v18, %v188
    %v197 = vadd.f32 %v19, %v193
    %198 = vst.msk [vmem:[#allocation2] sm:$0xff] %vm31, %v196
    %199 = vst.msk [vmem:[#allocation2 + $0x8] sm:$0xff] %vm31, %v197
    // Predicated region
    $region18: #{tpu_custom_call.1} parent=1 // pred_check
      _
    $region19: #{tpu_custom_call.1} parent=1 // pred_check_branch
      %201 = sbr.rel (0) target = $region21
    $region20: #{tpu_custom_call.1} parent=1 // pred_region
      %s203 = ssub.s32 256, 256
      %204 = vsyncadd [#allocation3], %s203
      %s205 = sshll.u32 [#allocation2], 4
      %s206 = int_to_ptr.vmem [resolvable:$true] %s205
      %211 = dma.vmem_to_hbm [thread:$0]  %s206, 256, %s4, [#allocation3], 128, 128, 8
    $region21: #{tpu_custom_call.1} parent=1 // pred_fallthru
      _
    // Predicated region
    $region22: #{tpu_custom_call.1} parent=1 // pred_check
      _
    $region23: #{tpu_custom_call.1} parent=1 // pred_check_branch
      %213 = sbr.rel (0) target = $region25
    $region24: #{tpu_custom_call.1} parent=1 // pred_region
      %214 = dma.done [#allocation3], 256
    $region25: #{tpu_custom_call.1} parent=1 // pred_fallthru
      _
    %215 = vsyncpa [#allocation3], 1

// kernel: tpu_custom_call.1
$region0: #{tpu_custom_call.1}
  #allocation0 [shape = 'u32[]', space=smem, size = 0x4, offset = 0x4, fixed_abs, tag = 'smem constant byte address 0x4 - core index']
  #allocation1 [shape = 'u32[144,128]{1,0:T(1,128)}', space=vmem, size = 0x12000, scoped, tag = 'internal scratch']
  %s0 = inlined_call_operand.vmem [shape: f32[16,32], index: 0, kind: input, shape index: {}]
  %s1 = inlined_call_operand.vmem [shape: f32[32,8], index: 1, kind: input, shape index: {}]
  %s2 = inlined_call_operand.vmem [shape: f32[1,8], index: 2, kind: input, shape index: {}]
  %s3 = inlined_call_operand.vmem [shape: f32[8,32], index: 3, kind: input, shape index: {}]
  %s4 = inlined_call_operand.hbm [shape: f32[16,32], index: 4, kind: output, shape index: {}]
  %s5 = sld [smem:[#allocation0]]
  $region26: #{tpu_custom_call.1} parent=0
    _
  %s7 = ssub.s32 1, %s5
  %s8 = scalar_select 0, %s7, %s5
  $region1: #{tpu_custom_call.1} parent=0
    #allocation2 [shape = 'u8[8192]{0}', space=vmem, size = 0x2000, scoped, tag = 'output window, operand 0, single buffered']
    #allocation3 [shape = 's32[1]{0}', space=sflag, size = 0x4, scoped, tag = 'scoped memory for tpu_custom_call.1']
    %9 = vsyncpa [#allocation3], 0
    // Predicated region
    $region2: #{tpu_custom_call.1} parent=1 // pred_check
      _
    $region3: #{tpu_custom_call.1} parent=1 // pred_check_branch
      %11 = sbr.rel (0) target = $region5
    $region4: #{tpu_custom_call.1} parent=1 // pred_region
      _
    $region5: #{tpu_custom_call.1} parent=1 // pred_fallthru
      _
    // Predicated region
    $region6: #{tpu_custom_call.1} parent=1 // pred_check
      _
    $region7: #{tpu_custom_call.1} parent=1 // pred_check_branch
      %13 = sbr.rel (0) target = $region9
    $region8: #{tpu_custom_call.1} parent=1 // pred_region
      _
    $region9: #{tpu_custom_call.1} parent=1 // pred_fallthru
      _
    // Predicated region
    $region10: #{tpu_custom_call.1} parent=1 // pred_check
      _
    $region11: #{tpu_custom_call.1} parent=1 // pred_check_branch
      %15 = sbr.rel (0) target = $region13
    $region12: #{tpu_custom_call.1} parent=1 // pred_region
      _
    $region13: #{tpu_custom_call.1} parent=1 // pred_fallthru
      _
    // Predicated region
    $region14: #{tpu_custom_call.1} parent=1 // pred_check
      _
    $region15: #{tpu_custom_call.1} parent=1 // pred_check_branch
      %17 = sbr.rel (0) target = $region17
    $region16: #{tpu_custom_call.1} parent=1 // pred_region
      _
    $region17: #{tpu_custom_call.1} parent=1 // pred_fallthru
      _
    %v18 = vld [vmem:[%s0] sm:$0xff]
    %v19 = vld [vmem:[%s0 + $0x8] sm:$0xff]
    %v20 = vld [vmem:[%s1] sm:$0xff]
    %v21 = vld [vmem:[%s1 + $0x8] sm:$0xff]
    %v22 = vld [vmem:[%s1 + $0x10] sm:$0xff]
    %v23 = vld [vmem:[%s1 + $0x18] sm:$0xff]
    %v24 = vld [vmem:[%s2] sm:$0x1]
    %v26 = vlaneseq
    %v27 = vshrl.u32 %v26, 7
    %v28 = vsub.s32 0, %v27
    %v29 = vrot.slane %v24, %v28
    %vm31 = vcmask 261120
    %v33 = vsel %vm31, %v18, 0
    %v36 = vsel %vm31, %v19, 0
    %38 = vmatprep.subr.mxu0 0.0
    %39 = vmatpush1.msra.mxu0 %v20
    %40 = vmatprep.subr.mxu0 0.0
    %41 = vmatpush1.msra.mxu0 %v21
    %42 = vmatprep.subr.mxu0 0.0
    %43 = vmatpush1.msra.mxu0 %v22
    %44 = vmatprep.subr.mxu0 0.0
    %45 = vmatpush1.msra.mxu0 %v23
    %46 = vmatprep.subr.mxu0 0.0
    %47 = vmatpush1.msra.mxu0 0.0
    %48 = vmatprep.subr.mxu0 0.0
    %49 = vmatpush1.msra.mxu0 0.0
    %50 = vmatprep.subr.mxu0 0.0
    %51 = vmatpush1.msra.mxu0 0.0
    %52 = vmatprep.subr.mxu0 0.0
    %53 = vmatpush1.msra.mxu0 0.0
    %54 = vmatprep.subr.mxu0 0.0
    %55 = vmatpush1.msra.mxu0 0.0
    %56 = vmatprep.subr.mxu0 0.0
    %57 = vmatpush1.msra.mxu0 0.0
    %58 = vmatprep.subr.mxu0 0.0
    %59 = vmatpush1.msra.mxu0 0.0
    %60 = vmatprep.subr.mxu0 0.0
    %61 = vmatpush1.msra.mxu0 0.0
    %62 = vmatprep.subr.mxu0 0.0
    %63 = vmatpush1.msra.mxu0 0.0
    %64 = vmatprep.subr.mxu0 0.0
    %65 = vmatpush1.msra.mxu0 0.0
    %66 = vmatprep.subr.mxu0 0.0
    %67 = vmatpush1.msra.mxu0 0.0
    %68 = vmatprep.subr.mxu0 0.0
    %69 = vmatpush1.msra.mxu0 0.0
    %70 = vmatprep.subr.mxu0 0.0
    %71 = vmatpush1.msra.mxu0 0.0
    %72 = vmatprep.subr.mxu0 0.0
    %73 = vmatpush1.msra.mxu0 0.0
    %74 = vmatprep.subr.mxu0 0.0
    %75 = vmatpush1.msra.mxu0 0.0
    %76 = vmatprep.subr.mxu0 0.0
    %77 = vmatpush1.msra.mxu0 0.0
    %78 = vmatprep.subr.mxu0 0.0
    %79 = vmatpush1.msra.mxu0 0.0
    %80 = vmatprep.subr.mxu0 0.0
    %81 = vmatpush1.msra.mxu0 0.0
    %82 = vmatprep.subr.mxu0 0.0
    %83 = vmatpush1.msra.mxu0 0.0
    %84 = vmatprep.subr.mxu0 0.0
    %85 = vmatpush1.msra.mxu0 0.0
    %86 = vmatprep.subr.mxu0 0.0
    %87 = vmatpush1.msra.mxu0 0.0
    %88 = vmatprep.subr.mxu0 0.0
    %89 = vmatpush1.msra.mxu0 0.0
    %90 = vmatprep.subr.mxu0 0.0
    %91 = vmatpush1.msra.mxu0 0.0
    %92 = vmatprep.subr.mxu0 0.0
    %93 = vmatpush1.msra.mxu0 0.0
    %94 = vmatprep.subr.mxu0 0.0
    %95 = vmatpush1.msra.mxu0 0.0
    %96 = vmatprep.subr.mxu0 0.0
    %97 = vmatpush1.msra.mxu0 0.0
    %98 = vmatprep.subr.mxu0 0.0
    %99 = vmatpush1.msra.mxu0 0.0
    %100 = vmatprep.subr.mxu0 0.0
    %101 = vmatpush1.msra.mxu0 0.0
    %102 = vmatprep.mubr.f32.mxu0 0.0
    %103 = vmatmul.mubr.f32.gmra.mrb[0].mxu0 %v33
    %v104 = vpop.f32.mrb[0].mxu0
    %v105 = vadd.f32 %v29, %v104
    %v106 = vpop.f32.mrb[0].mxu0
    %107 = vmatprep.mubr.f32.mxu0 0.0
    %108 = vmatmul.mubr.f32.gmra.mrb[0].mxu0 %v36
    %v109 = vpop.f32.mrb[0].mxu0
    %v110 = vadd.f32 %v29, %v109
    %v111 = vpop.f32.mrb[0].mxu0
    %112 = vdwg.mxu0
    %v113 = vld [vmem:[%s3] sm:$0xff]
    %vm114 = vcmask 64512
    %v116 = vsel %vm114, %v105, 0
    %v119 = vsel %vm114, %v110, 0
    %121 = vmatprep.subr.mxu0 0.0
    %122 = vmatpush1.msra.mxu0 %v113
    %123 = vmatprep.subr.mxu0 0.0
    %124 = vmatpush1.msra.mxu0 0.0
    %125 = vmatprep.subr.mxu0 0.0
    %126 = vmatpush1.msra.mxu0 0.0
    %127 = vmatprep.subr.mxu0 0.0
    %128 = vmatpush1.msra.mxu0 0.0
    %129 = vmatprep.subr.mxu0 0.0
    %130 = vmatpush1.msra.mxu0 0.0
    %131 = vmatprep.subr.mxu0 0.0
    %132 = vmatpush1.msra.mxu0 0.0
    %133 = vmatprep.subr.mxu0 0.0
    %134 = vmatpush1.msra.mxu0 0.0
    %135 = vmatprep.subr.mxu0 0.0
    %136 = vmatpush1.msra.mxu0 0.0
    %137 = vmatprep.subr.mxu0 0.0
    %138 = vmatpush1.msra.mxu0 0.0
    %139 = vmatprep.subr.mxu0 0.0
    %140 = vmatpush1.msra.mxu0 0.0
    %141 = vmatprep.subr.mxu0 0.0
    %142 = vmatpush1.msra.mxu0 0.0
    %143 = vmatprep.subr.mxu0 0.0
    %144 = vmatpush1.msra.mxu0 0.0
    %145 = vmatprep.subr.mxu0 0.0
    %146 = vmatpush1.msra.mxu0 0.0
    %147 = vmatprep.subr.mxu0 0.0
    %148 = vmatpush1.msra.mxu0 0.0
    %149 = vmatprep.subr.mxu0 0.0
    %150 = vmatpush1.msra.mxu0 0.0
    %151 = vmatprep.subr.mxu0 0.0
    %152 = vmatpush1.msra.mxu0 0.0
    %153 = vmatprep.subr.mxu0 0.0
    %154 = vmatpush1.msra.mxu0 0.0
    %155 = vmatprep.subr.mxu0 0.0
    %156 = vmatpush1.msra.mxu0 0.0
    %157 = vmatprep.subr.mxu0 0.0
    %158 = vmatpush1.msra.mxu0 0.0
    %159 = vmatprep.subr.mxu0 0.0
    %160 = vmatpush1.msra.mxu0 0.0
    %161 = vmatprep.subr.mxu0 0.0
    %162 = vmatpush1.msra.mxu0 0.0
    %163 = vmatprep.subr.mxu0 0.0
    %164 = vmatpush1.msra.mxu0 0.0
    %165 = vmatprep.subr.mxu0 0.0
    %166 = vmatpush1.msra.mxu0 0.0
    %167 = vmatprep.subr.mxu0 0.0
    %168 = vmatpush1.msra.mxu0 0.0
    %169 = vmatprep.subr.mxu0 0.0
    %170 = vmatpush1.msra.mxu0 0.0
    %171 = vmatprep.subr.mxu0 0.0
    %172 = vmatpush1.msra.mxu0 0.0
    %173 = vmatprep.subr.mxu0 0.0
    %174 = vmatpush1.msra.mxu0 0.0
    %175 = vmatprep.subr.mxu0 0.0
    %176 = vmatpush1.msra.mxu0 0.0
    %177 = vmatprep.subr.mxu0 0.0
    %178 = vmatpush1.msra.mxu0 0.0
    %179 = vmatprep.subr.mxu0 0.0
    %180 = vmatpush1.msra.mxu0 0.0
    %181 = vmatprep.subr.mxu0 0.0
    %182 = vmatpush1.msra.mxu0 0.0
    %183 = vmatprep.subr.mxu0 0.0
    %184 = vmatpush1.msra.mxu0 0.0
    %185 = vmatprep.mubr.f32.mxu0 0.0
    %186 = vmatmul.mubr.f32.gmra.mrb[0].mxu0 %v116
    %v187 = vpop.f32.mrb[0].mxu0
    %v188 = vadd.f32 0.0, %v187
    %v189 = vpop.f32.mrb[0].mxu0
    %190 = vmatprep.mubr.f32.mxu0 0.0
    %191 = vmatmul.mubr.f32.gmra.mrb[0].mxu0 %v119
    %v192 = vpop.f32.mrb[0].mxu0
    %v193 = vadd.f32 0.0, %v192
    %v194 = vpop.f32.mrb[0].mxu0
    %195 = vdwg.mxu0
    %v196 = vadd.f32 %v18, %v188
    %v197 = vadd.f32 %v19, %v193
    %198 = vst.msk [vmem:[#allocation2] sm:$0xff] %vm31, %v196
    %199 = vst.msk [vmem:[#allocation2 + $0x8] sm:$0xff] %vm31, %v197
    // Predicated region
    $region18: #{tpu_custom_call.1} parent=1 // pred_check
      _
    $region19: #{tpu_custom_call.1} parent=1 // pred_check_branch
      %201 = sbr.rel (0) target = $region21
    $region20: #{tpu_custom_call.1} parent=1 // pred_region
      %s203 = ssub.s32 256, 256
      %204 = vsyncadd [#allocation3], %s203
      %s205 = sshll.u32 [#allocation2], 4
      %s206 = int_to_ptr.vmem [resolvable:$true] %s205
      %211 = dma.vmem_to_hbm [thread:$0]  %s206, 256, %s4, [#allocation3], 128, 128, 8
    $region21: #{tpu_custom_call.1} parent=1 // pred_fallthru
      _
    // Predicated region
    $region22: #{tpu_custom_call.1} parent=1 // pred_check
      _
    $region23: #{tpu_custom_call.1} parent=1 // pred_check_branch
      %213 = sbr.rel (0) target = $region25
    $region24: #{tpu_custom_call.1} parent=1 // pred_region
      %214 = dma.done [#allocation3], 256
    $region25: #{tpu_custom_call.1} parent=1 // pred_fallthru
      _
    %215 = vsyncpa [#allocation3], 1

</llo_original>
